<compile_context>
chip_gen: v7x
topology: tpu7x:2x2x1
jax: 0.10.0
libtpu: 0.0.40
codegen_flags: <defaults>
</compile_context>

<pallas_src>
import jax
import jax.numpy as jnp
from jax.experimental import pallas as pl
from jax.experimental.pallas import tpu as pltpu


def _relus001_kernel(x_ref, o_ref):
    # Literal relu(x + 0.01) - 0.01 (bit-exact vs the PyTorch module); the
    # extra VALU ops are free on this DMA-bound kernel.
    dt = o_ref.dtype
    c = jnp.asarray(0.01, dtype=dt)
    zero = jnp.asarray(0.0, dtype=dt)
    o_ref[...] = jnp.maximum(x_ref[...] + c, zero) - c


def _round_up(v: int, m: int) -> int:
    return ((v + m - 1) // m) * m


def _chip_config():
    """(block_bytes, vmem_limit_bytes, tensorcores_per_chip) by generation."""
    kind = ""
    try:
        kind = jax.devices()[0].device_kind.lower()
    except Exception:
        pass
    if "v7" in kind:                                   # v7x: 3.2 TB/s, 64 MiB VMEM
        return 6 << 20, 48 << 20, 2
    if "v6" in kind:                                   # v6e: 128 MiB VMEM
        return 8 << 20, 64 << 20, 1
    if "v5" in kind and ("lite" in kind or "v5e" in kind):   # v5e
        return (7 << 20) // 2, 32 << 20, 1             # 3.5 MiB blocks
    if "v5p" in kind or "v4" in kind:                  # megacore chips
        return 4 << 20, 32 << 20, 2
    return 4 << 20, 32 << 20, 1                        # unknown: conservative


def _pick_blocks(total: int, unit: int, max_block: int, min_splits: int):
    """Pick (block, nsteps). block is a multiple of `unit` (or == total),
    roughly <= max_block; nsteps is a multiple of `min_splits` when feasible."""
    if total <= unit or (min_splits <= 1 and total <= max_block):
        return total, 1
    nb = pl.cdiv(total, max_block)
    if min_splits > 1:
        nb = _round_up(max(nb, min_splits), min_splits)
    block = min(total, _round_up(pl.cdiv(total, nb), unit))
    nsteps = pl.cdiv(total, block)
    if min_splits > 1 and nsteps > 1 and nsteps % min_splits:
        # Rounding the block up to `unit` left an odd step count; grow the
        # block slightly so both TensorCores get an equal number of steps.
        nb2 = (nsteps // min_splits) * min_splits
        if nb2 >= min_splits:
            block2 = min(total, _round_up(pl.cdiv(total, nb2), unit))
            nsteps2 = pl.cdiv(total, block2)
            if nsteps2 % min_splits == 0:
                block, nsteps = block2, nsteps2
    return block, nsteps


def relus001(x: jax.Array) -> jax.Array:
    """y = relu(x + 0.01) - 0.01, elementwise, via a Pallas TPU kernel."""
    orig_shape = x.shape
    dtype = x.dtype
    n = x.size
    if n == 0:
        return x

    itemsize = jnp.dtype(dtype).itemsize
    block_bytes, vmem_limit, cores = _chip_config()

    cparams = pltpu.CompilerParams(
        dimension_semantics=("parallel",),
        vmem_limit_bytes=vmem_limit,
    )
    cost = pl.CostEstimate(
        flops=3 * n, transcendentals=0, bytes_accessed=2 * n * itemsize
    )

    x_flat = jnp.ravel(x)  # free (metadata-only) for contiguous inputs

    # Widest lane-dense last dim that divides n exactly (=> zero-copy reshape).
    lanes = 0
    for cand in (1024, 512, 256, 128):
        if n % cand == 0:
            lanes = cand
            break

    if lanes:
        # Fast, lane-aligned path.
        sublane = max(8, 32 // itemsize)  # f32:8, bf16:16, i8/fp8:32
        rows = n // lanes
        max_block_rows = max(sublane, block_bytes // (lanes * itemsize))
        block_rows, nsteps = _pick_blocks(rows, sublane, max_block_rows, cores)
        out = pl.pallas_call(
            _relus001_kernel,
            out_shape=jax.ShapeDtypeStruct((rows, lanes), dtype),
            grid_spec=pl.GridSpec(
                grid=(nsteps,),
                in_specs=[pl.BlockSpec((block_rows, lanes), lambda i: (i, 0))],
                out_specs=pl.BlockSpec((block_rows, lanes), lambda i: (i, 0)),
            ),
            compiler_params=cparams,
            cost_estimate=cost,
        )(x_flat.reshape(rows, lanes))
        return out.reshape(orig_shape)

    # Ragged path (n not a multiple of 128): run a 1-D grid over the flat view
    # and let Pallas mask the partial final block -- avoids the full-tensor
    # jnp.pad / tail-slice copies entirely.
    unit = max(8, 32 // itemsize) * 128
    max_block_elems = max(unit, block_bytes // itemsize)
    block_elems, nsteps = _pick_blocks(n, unit, max_block_elems, cores)
    out = pl.pallas_call(
        _relus001_kernel,
        out_shape=jax.ShapeDtypeStruct((n,), dtype),
        grid_spec=pl.GridSpec(
            grid=(nsteps,),
            in_specs=[pl.BlockSpec((block_elems,), lambda i: (i,))],
            out_specs=pl.BlockSpec((block_elems,), lambda i: (i,)),
        ),
        compiler_params=cparams,
        cost_estimate=cost,
    )(x_flat)
    return out.reshape(orig_shape)


def relus001_ref(x: jax.Array) -> jax.Array:
    return jnp.maximum(x + 0.01, 0.0) - 0.01


if __name__ == "__main__":
    key = jax.random.PRNGKey(0)
    k0, k1, k2 = jax.random.split(key, 3)

    # NCHW conv-denoiser activation shape (lane-aligned fast path).
    x = jax.random.normal(k0, (2, 4, 16, 16), dtype=jnp.float32)
    y = jax.block_until_ready(relus001(x))
    assert y.shape == x.shape and y.dtype == x.dtype
    assert jnp.allclose(y, relus001_ref(x), atol=1e-6), "mismatch (aligned f32)"

    # Ragged size (not a multiple of 128): exercises the 1-D masked path.
    x2 = jax.random.normal(k1, (3, 5, 7), dtype=jnp.float32)
    y2 = jax.block_until_ready(relus001(x2))
    assert jnp.allclose(y2, relus001_ref(x2), atol=1e-6), "mismatch (ragged f32)"

    # Low-precision check (bf16 constant rounding / sublane=16 path).
    x3 = jax.random.normal(k2, (4, 256), dtype=jnp.bfloat16)
    y3 = jax.block_until_ready(relus001(x3))
    assert jnp.allclose(
        y3.astype(jnp.float32), relus001_ref(x3).astype(jnp.float32), atol=1e-2
    ), "mismatch (bf16)"

    print("KERNEL_OK")
</pallas_src>

<mosaic_0001>
module attributes {stable_mosaic.version = 11 : i64} {
  func.func @_relus001_kernel(%arg0: i32, %arg1: memref<2x1024xf32, #tpu.memory_space<vmem>>, %arg2: memref<2x1024xf32, #tpu.memory_space<vmem>>) attributes {dimension_semantics = [#tpu.dimension_semantics<parallel>], iteration_bounds = array<i64: 1>, scalar_prefetch = 0 : i64, scratch_operands = 0 : i64, tpu.core_type = #tpu.core_type<tc>, window_params = [{transform_indices = @transform_0, window_bounds = array<i64: 2, 1024>}, {transform_indices = @transform_1, window_bounds = array<i64: 2, 1024>}]} {
    %c0 = arith.constant 0 : index
    %c0_0 = arith.constant 0 : index
    %0 = vector.load %arg1[%c0, %c0_0] : memref<2x1024xf32, #tpu.memory_space<vmem>>, vector<2x1024xf32>
    %cst = arith.constant 0.00999999977 : f32
    %1 = vector.broadcast %cst : f32 to vector<2x1024xf32>
    %2 = arith.addf %0, %1 : vector<2x1024xf32>
    %cst_1 = arith.constant 0.000000e+00 : f32
    %3 = vector.broadcast %cst_1 : f32 to vector<2x1024xf32>
    %4 = arith.maximumf %2, %3 : vector<2x1024xf32>
    %cst_2 = arith.constant 0.00999999977 : f32
    %5 = vector.broadcast %cst_2 : f32 to vector<2x1024xf32>
    %6 = arith.subf %4, %5 : vector<2x1024xf32>
    %c0_3 = arith.constant 0 : index
    %c0_4 = arith.constant 0 : index
    %7 = vector.load %arg2[%c0_3, %c0_4] : memref<2x1024xf32, #tpu.memory_space<vmem>>, vector<2x1024xf32>
    tpu.vector_store %arg2[%c0_3, %c0_4], %6 {strides = array<i32>} : memref<2x1024xf32, #tpu.memory_space<vmem>>, vector<2x1024xf32>,
    return
  }
  func.func @transform_0(%arg0: i32) -> (i32, i32) {
    %c0_i32 = arith.constant 0 : i32
    %c0_i32_0 = arith.constant 0 : i32
    return %arg0, %c0_i32 : i32, i32
  }
  func.func @transform_1(%arg0: i32) -> (i32, i32) {
    %c0_i32 = arith.constant 0 : i32
    %c0_i32_0 = arith.constant 0 : i32
    return %arg0, %c0_i32 : i32, i32
  }
}

</mosaic_0001>

<llo_original>
// kernel: tpu_custom_call.1
$region0: #{tpu_custom_call.1}
  #allocation0 [shape = 'u32[]', space=smem, size = 0x4, offset = 0x4, fixed_abs, tag = 'smem constant byte address 0x4 - core index']
  #allocation1 [shape = 'u32[144,128]{1,0:T(1,128)}', space=vmem, size = 0x12000, scoped, tag = 'internal scratch']
  %s0 = inlined_call_operand.hbm [shape: f32[2,1024], index: 0, kind: input, shape index: {}]
  %s1 = inlined_call_operand.hbm [shape: f32[2,1024], index: 1, kind: output, shape index: {}]
  %s2 = sld [smem:[#allocation0]]
  $region18: #{tpu_custom_call.1} parent=0
    _
  %s4 = ssub.s32 1, %s2
  %s5 = scalar_select 0, %s4, %s2
  $region1: #{tpu_custom_call.1} parent=0
    #allocation2 [shape = 'u8[8192]{0}', space=vmem, size = 0x2000, scoped, tag = 'input window, operand 0, single buffered']
    #allocation3 [shape = 's32[1]{0}', space=sflag, size = 0x4, scoped, tag = 'scoped memory for tpu_custom_call.1']
    #allocation4 [shape = 's32[1]{0}', space=sflag, size = 0x4, scoped, tag = 'scoped memory for tpu_custom_call.1']
    #allocation5 [shape = 'u8[8192]{0}', space=vmem, size = 0x2000, scoped, tag = 'output window, operand 0, single buffered']
    %6 = vsyncpa [#allocation3], 0
    %7 = vsyncpa [#allocation4], 0
    // Predicated region
    $region2: #{tpu_custom_call.1} parent=1 // pred_check
      _
    $region3: #{tpu_custom_call.1} parent=1 // pred_check_branch
      %9 = sbr.rel (0) target = $region5
    $region4: #{tpu_custom_call.1} parent=1 // pred_region
      %s11 = ssub.s32 256, 256
      %12 = vsyncadd [#allocation3], %s11
      %s14 = sshll.u32 [#allocation2], 4
      %s15 = int_to_ptr.vmem [resolvable:$true] %s14
      %17 = dma.hbm_to_vmem [thread:$0]  %s0, 256, %s15, [#allocation3]
    $region5: #{tpu_custom_call.1} parent=1 // pred_fallthru
      _
    // Predicated region
    $region6: #{tpu_custom_call.1} parent=1 // pred_check
      _
    $region7: #{tpu_custom_call.1} parent=1 // pred_check_branch
      %19 = sbr.rel (0) target = $region9
    $region8: #{tpu_custom_call.1} parent=1 // pred_region
      %20 = dma.done [#allocation3], 256
    $region9: #{tpu_custom_call.1} parent=1 // pred_fallthru
      _
    %v21 = vld [vmem:[#allocation2] sm:$0xff]
    %v22 = vld [vmem:[#allocation2 + $0x8] sm:$0xff]
    %v23 = vadd.f32 %v21, 0.01
    %v24 = vadd.f32 %v22, 0.01
    %v25 = vmax.f32 %v23, 0.0
    %v26 = vmax.f32 %v24, 0.0
    %v27 = vsub.f32 %v25, 0.01
    %v28 = vsub.f32 %v26, 0.01
    %29 = vst [vmem:[#allocation5] sm:$0xff] %v27
    %30 = vst [vmem:[#allocation5 + $0x8] sm:$0xff] %v28
    // Predicated region
    $region10: #{tpu_custom_call.1} parent=1 // pred_check
      _
    $region11: #{tpu_custom_call.1} parent=1 // pred_check_branch
      %32 = sbr.rel (0) target = $region13
    $region12: #{tpu_custom_call.1} parent=1 // pred_region
      %s34 = ssub.s32 256, 256
      %35 = vsyncadd [#allocation4], %s34
      %s37 = sshll.u32 [#allocation5], 4
      %s38 = int_to_ptr.vmem [resolvable:$true] %s37
      %40 = dma.vmem_to_hbm [thread:$0]  %s38, 256, %s1, [#allocation4]
    $region13: #{tpu_custom_call.1} parent=1 // pred_fallthru
      _
    // Predicated region
    $region14: #{tpu_custom_call.1} parent=1 // pred_check
      _
    $region15: #{tpu_custom_call.1} parent=1 // pred_check_branch
      %42 = sbr.rel (0) target = $region17
    $region16: #{tpu_custom_call.1} parent=1 // pred_region
      %43 = dma.done [#allocation4], 256
    $region17: #{tpu_custom_call.1} parent=1 // pred_fallthru
      _
    %44 = vsyncpa [#allocation3], 1
    %45 = vsyncpa [#allocation4], 1

</llo_original>
